<compile_context>
chip_gen: v7x
topology: tpu7x:2x2x1
jax: 0.10.0
libtpu: 0.0.40
codegen_flags: <defaults>
</compile_context>

<pallas_src>
import functools

import numpy as np
import jax
import jax.numpy as jnp
from jax.experimental import pallas as pl
from jax.experimental.pallas import tpu as pltpu


# ----------------------------------------------------------------------------
# Lattice (host-side constant setup, numpy complex128 — mirrors the torch class)
# ----------------------------------------------------------------------------
class MechanicalGrapheneLattice:
    def __init__(self, l: float, alpha: float) -> None:
        self.l = l
        self.alpha = alpha
        x = np.array([[1.0], [0.0]], dtype=np.complex128)
        y = np.array([[0.0], [1.0]], dtype=np.complex128)
        self.a1 = np.sqrt(3) * l * x
        self.a2 = (np.sqrt(3) * x + 3 * y) * l / 2.0
        self.r1 = (self.a1 + self.a2) / 3.0
        self.r2 = (-2 * self.a1 + self.a2) / 3.0
        self.r3 = (self.a1 - 2 * self.a2) / 3.0
        self.r1h = self.r1 / np.linalg.norm(self.r1)
        self.r2h = self.r2 / np.linalg.norm(self.r2)
        self.r3h = self.r3 / np.linalg.norm(self.r3)
        # elementwise (2,1)*(1,2) broadcast == outer product, as in torch
        self.r11 = self.r1h * self.r1h.conj().T
        self.r22 = self.r2h * self.r2h.conj().T
        self.r33 = self.r3h * self.r3h.conj().T
        z = np.array([[0.0, 1.0], [-1.0, 0.0]], dtype=np.complex128)
        r1_ = z @ self.r1h
        r2_ = z @ self.r2h
        r3_ = z @ self.r3h
        r11_ = r1_ * r1_.conj().T
        r22_ = r2_ * r2_.conj().T
        r33_ = r3_ * r3_.conj().T
        self.g1 = (1 - alpha) * r11_ + self.r11
        self.g2 = (1 - alpha) * r22_ + self.r22
        self.g3 = (1 - alpha) * r33_ + self.r33


def build_constants(lat: MechanicalGrapheneLattice, omega0: float, Omega: float):
    """Precompute everything that does not depend on k.

    H(k) = Minv @ (w0^2 * (A + K1*P1 + conj(K1)*Q1 + K2*P2 + conj(K2)*Q2))
    Minv and w0^2 are constant, so fold them in:
        Cj = w0^2 * vec(Minv @ Xj),  X = [A, P1, Q1, P2, Q2]
    and regroup by the real coefficients [1, Re K1, Im K1, Re K2, Im K2] into a
    (8, 128) real plane table D with packed [re(64) | im(64)] lanes:
        H_packed = D[0] + ReK1*D[1] + ImK1*D[2] + ReK2*D[3] + ImK2*D[4]
    The kernel consumes D transposed: D_T (128, 8), columns = planes.
    """
    sy = np.array([[0.0, -1j], [1j, 0.0]], dtype=np.complex128)  # Pauli y
    z2 = np.zeros((2, 2), dtype=np.complex128)
    z4 = np.zeros((4, 4), dtype=np.complex128)
    i4 = np.eye(4, dtype=np.complex128)
    L12 = np.block([[-2 * Omega * sy, z2], [z2, -2 * Omega * sy]])
    M = np.block([[z4, i4], [i4, z4]]).astype(np.complex128)
    Minv = np.linalg.inv(M)

    r11, r22, r33 = lat.r11, lat.r22, lat.r33
    S = r11 + r22 + r33

    # L (before w0^2 scaling) = A + K1*P1 + conj(K1)*Q1 + K2*P2 + conj(K2)*Q2
    A = np.zeros((8, 8), dtype=np.complex128)
    A[0:2, 0:2] = S
    A[2:4, 2:4] = S
    A[0:2, 2:4] = -r11
    A[2:4, 0:2] = -r11
    A[0:4, 4:8] = L12
    A[4:8, 4:8] = i4          # bottom row of L is [z4, i4]

    P1 = np.zeros((8, 8), dtype=np.complex128); P1[2:4, 0:2] = -r22   # * K1
    Q1 = np.zeros((8, 8), dtype=np.complex128); Q1[0:2, 2:4] = -r22   # * conj(K1)
    P2 = np.zeros((8, 8), dtype=np.complex128); P2[2:4, 0:2] = -r33   # * K2
    Q2 = np.zeros((8, 8), dtype=np.complex128); Q2[0:2, 2:4] = -r33   # * conj(K2)

    w0sq = float(omega0) ** 2
    C = [w0sq * (Minv @ X).reshape(64) for X in (A, P1, Q1, P2, Q2)]  # complex (64,)
    C0, C1, C2, C3, C4 = C

    D = np.zeros((8, 128), dtype=np.float64)   # rows 5..7 are zero padding
    D[0, :64] = C0.real;             D[0, 64:] = C0.imag
    D[1, :64] = (C1 + C2).real;      D[1, 64:] = (C1 + C2).imag      # coeff Re(K1)
    D[2, :64] = (C2 - C1).imag;      D[2, 64:] = (C1 - C2).real      # coeff Im(K1)
    D[3, :64] = (C3 + C4).real;      D[3, 64:] = (C3 + C4).imag      # coeff Re(K2)
    D[4, :64] = (C4 - C3).imag;      D[4, 64:] = (C3 - C4).real      # coeff Im(K2)

    a_mat = np.real(np.hstack([lat.a1, lat.a2]))   # (2, 2), a1/a2 are purely real

    return dict(D_T=np.ascontiguousarray(D.T), a_mat=a_mat)


# ----------------------------------------------------------------------------
# Pallas kernel (batch on the lane axis)
# ----------------------------------------------------------------------------
def _bulk_h_kernel(a_consts, real_k, k_ref, d_ref, h_ref):
    """k_ref: (8, TB)   rows [kx_re, ky_re, kx_im, ky_im, 0, 0, 0, 0]
       d_ref: (128, 8)  columns = constant basis planes (packed [Re(64)|Im(64)])
       h_ref: (128, TB) packed H, batch on lanes."""
    a1x, a1y, a2x, a2y = a_consts

    kx_re = k_ref[0:1, :]                               # (1, TB) lane-dense
    ky_re = k_ref[1:2, :]
    ph1 = kx_re * a1x + ky_re * a1y                     # Re(conj(k)^T a1)
    ph2 = kx_re * a2x + ky_re * a2y
    c1, s1 = jnp.cos(ph1), jnp.sin(ph1)
    c2, s2 = jnp.cos(ph2), jnp.sin(ph2)

    if real_k:
        # K_n = exp(i * k_re . a_n)
        k1r, k1i, k2r, k2i = c1, s1, c2, s2
    else:
        # K_n = exp(i * conj(k)^T a_n) = exp(k_im . a_n) * (cos + i sin)(k_re . a_n)
        kx_im = k_ref[2:3, :]
        ky_im = k_ref[3:4, :]
        amp1 = jnp.exp(kx_im * a1x + ky_im * a1y)
        amp2 = jnp.exp(kx_im * a2x + ky_im * a2y)
        k1r, k1i = amp1 * c1, amp1 * s1
        k2r, k2i = amp2 * c2, amp2 * s2

    d = d_ref[...]                                      # (128, 8)
    # 5-term FMA: (128,1) columns broadcast over lanes, (1,TB) coeffs over sublanes.
    h_ref[...] = (d[:, 0:1]
                  + d[:, 1:2] * k1r + d[:, 2:3] * k1i
                  + d[:, 3:4] * k2r + d[:, 4:5] * k2i)


def _round_up(x: int, m: int) -> int:
    return ((x + m - 1) // m) * m


def _tensorcores_per_chip() -> int:
    """Best-effort: >= 2 on v7x (megacore), 1 on v5e/v6e. Falls back to 1."""
    try:
        d = jax.devices()[0]
        n = getattr(d, "num_cores", None)
        if n:
            return int(n)
    except Exception:
        pass
    return 1


# ----------------------------------------------------------------------------
# jitted device path: packing + pallas_call + epilogue all stay on device
# ----------------------------------------------------------------------------
@functools.partial(jax.jit, static_argnames=("a_consts", "tb", "b_pad", "real_k"))
def _bulk_h_device(k_re, k_im, d_t, *, a_consts, tb, b_pad, real_k):
    B = k_re.shape[0]
    kp = jnp.zeros((8, b_pad), jnp.float32)
    kp = kp.at[0, :B].set(k_re[:, 0])
    kp = kp.at[1, :B].set(k_re[:, 1])
    kp = kp.at[2, :B].set(k_im[:, 0])
    kp = kp.at[3, :B].set(k_im[:, 1])

    kernel = functools.partial(_bulk_h_kernel, a_consts, real_k)
    h = pl.pallas_call(
        kernel,
        out_shape=jax.ShapeDtypeStruct((128, b_pad), jnp.float32),
        grid=(b_pad // tb,),
        in_specs=[pl.BlockSpec((8, tb), lambda i: (0, i)),
                  pl.BlockSpec((128, 8), lambda i: (0, 0))],
        out_specs=pl.BlockSpec((128, tb), lambda i: (0, i)),
        compiler_params=pltpu.CompilerParams(dimension_semantics=("parallel",)),
    )(kp, d_t)                                          # (128, b_pad)

    h = h[:, :B]
    h_re = jnp.transpose(h[:64, :]).reshape(B, 8, 8)
    h_im = jnp.transpose(h[64:, :]).reshape(B, 8, 8)
    return jax.lax.complex(h_re, h_im)                  # complex64


def bulk_hamiltonian_pallas(k, lat, omega0, Omega, tb=2048):
    """k: (B, 2, 1) complex array of k-points. Returns (B, 8, 8) complex64."""
    consts = build_constants(lat, omega0, Omega)

    k = np.asarray(k, dtype=np.complex128)
    B = k.shape[0]
    k2 = k.reshape(B, 2)
    k_re = np.ascontiguousarray(k2.real).astype(np.float32)
    k_im = np.ascontiguousarray(k2.imag).astype(np.float32)
    real_k = bool(np.all(k2.imag == 0.0))

    # --- batch tile: big single tile; only force >= 2 grid steps on multi-TC chips (v7x)
    tb = max(128, (int(tb) // 128) * 128)
    b_lane = _round_up(B, 128)
    tb = min(tb, b_lane)
    if _tensorcores_per_chip() >= 2 and b_lane >= 256:
        tb = min(tb, max(128, _round_up((b_lane + 1) // 2, 128)))
    b_pad = _round_up(B, tb)

    d_t = jnp.asarray(consts["D_T"], dtype=jnp.float32)          # (128, 8)
    a = consts["a_mat"]                                          # [[a1x, a2x], [a1y, a2y]]
    a_consts = (float(a[0, 0]), float(a[1, 0]), float(a[0, 1]), float(a[1, 1]))

    return _bulk_h_device(jnp.asarray(k_re), jnp.asarray(k_im), d_t,
                          a_consts=a_consts, tb=tb, b_pad=b_pad, real_k=real_k)


# ----------------------------------------------------------------------------
# Pure numpy reference (literal transcription of the torch forward, cdouble)
# ----------------------------------------------------------------------------
def reference_forward(k, lat, omega0, Omega):
    k = np.asarray(k, dtype=np.complex128)
    B = k.shape[0]
    sy = np.array([[0.0, -1j], [1j, 0.0]], dtype=np.complex128)
    z2 = np.zeros((2, 2), dtype=np.complex128)
    z4 = np.zeros((4, 4), dtype=np.complex128)
    i4 = np.eye(4, dtype=np.complex128)
    L12 = np.block([[-2 * Omega * sy, z2], [z2, -2 * Omega * sy]])
    M = np.block([[z4, i4], [i4, z4]]).astype(np.complex128)
    Minv = np.linalg.inv(M)

    r11, r22, r33 = lat.r11, lat.r22, lat.r33
    S = r11 + r22 + r33

    K1 = np.exp(1j * (np.conj(k).transpose(0, 2, 1) @ np.broadcast_to(lat.a1, (B, 2, 1)))).reshape(B)
    K2 = np.exp(1j * (np.conj(k).transpose(0, 2, 1) @ np.broadcast_to(lat.a2, (B, 2, 1)))).reshape(B)

    Hs = np.zeros((B, 8, 8), dtype=np.complex128)
    for i in range(B):
        L11 = np.block([[S, -(r11 + np.conj(K1[i]) * r22 + np.conj(K2[i]) * r33)],
                        [-(r11 + K1[i] * r22 + K2[i] * r33), S]])
        L = omega0 ** 2 * np.block([[L11, L12], [z4, i4]])
        Hs[i] = Minv @ L
    return Hs


# ----------------------------------------------------------------------------
if __name__ == "__main__":
    l, alpha, omega0, Omega = 1.0, 0.6, 1.2, 0.3
    lat = MechanicalGrapheneLattice(l, alpha)

    B = 16
    key = jax.random.PRNGKey(0)
    kr_key, ki_key = jax.random.split(key)
    k_real = np.asarray(jax.random.uniform(kr_key, (B, 2, 1), minval=-2.0, maxval=2.0))
    k_imag = 0.05 * np.asarray(jax.random.uniform(ki_key, (B, 2, 1), minval=-1.0, maxval=1.0))
    k = (k_real + 1j * k_imag).astype(np.complex128)

    # complex-k path (exercises exp/cos/sin)
    H = jax.block_until_ready(bulk_hamiltonian_pallas(k, lat, omega0, Omega))
    H_ref = reference_forward(k, lat, omega0, Omega)
    assert np.allclose(np.asarray(H), H_ref, atol=1e-4, rtol=1e-4), "complex-k mismatch vs reference"

    # real-k fast path (exp compiled out)
    k_r = k_real.astype(np.complex128)
    H2 = jax.block_until_ready(bulk_hamiltonian_pallas(k_r, lat, omega0, Omega))
    H2_ref = reference_forward(k_r, lat, omega0, Omega)
    assert np.allclose(np.asarray(H2), H2_ref, atol=1e-4, rtol=1e-4), "real-k mismatch vs reference"

    print("KERNEL_OK")
</pallas_src>

<mosaic_0001>
module attributes {stable_mosaic.version = 11 : i64} {
  func.func @_bulk_h_kernel(%arg0: i32, %arg1: memref<8x128xf32, #tpu.memory_space<vmem>>, %arg2: memref<128x8xf32, #tpu.memory_space<vmem>>, %arg3: memref<128x128xf32, #tpu.memory_space<vmem>>) attributes {dimension_semantics = [#tpu.dimension_semantics<parallel>], iteration_bounds = array<i64: 1>, scalar_prefetch = 0 : i64, scratch_operands = 0 : i64, tpu.core_type = #tpu.core_type<tc>, window_params = [{transform_indices = @transform_0, window_bounds = array<i64: 8, 128>}, {pipeline_mode = #tpu.pipeline_mode<synchronous>, transform_indices = @transform_1, window_bounds = array<i64: 128, 8>}, {transform_indices = @transform_2, window_bounds = array<i64: 128, 128>}]} {
    %c0 = arith.constant 0 : index
    %c0_0 = arith.constant 0 : index
    %0 = vector.load %arg1[%c0, %c0_0] : memref<8x128xf32, #tpu.memory_space<vmem>>, vector<1x128xf32>
    %c1 = arith.constant 1 : index
    %c0_1 = arith.constant 0 : index
    %1 = vector.load %arg1[%c1, %c0_1] : memref<8x128xf32, #tpu.memory_space<vmem>>, vector<1x128xf32>
    %cst = arith.constant 1.73205078 : f32
    %2 = vector.broadcast %cst : f32 to vector<1x128xf32>
    %3 = arith.mulf %0, %2 : vector<1x128xf32>
    %cst_2 = arith.constant 0.000000e+00 : f32
    %4 = vector.broadcast %cst_2 : f32 to vector<1x128xf32>
    %5 = arith.mulf %1, %4 : vector<1x128xf32>
    %6 = arith.addf %3, %5 : vector<1x128xf32>
    %cst_3 = arith.constant 0.866025388 : f32
    %7 = vector.broadcast %cst_3 : f32 to vector<1x128xf32>
    %8 = arith.mulf %0, %7 : vector<1x128xf32>
    %cst_4 = arith.constant 1.500000e+00 : f32
    %9 = vector.broadcast %cst_4 : f32 to vector<1x128xf32>
    %10 = arith.mulf %1, %9 : vector<1x128xf32>
    %11 = arith.addf %8, %10 : vector<1x128xf32>
    %12 = math.cos %6 : vector<1x128xf32>
    %13 = math.sin %6 : vector<1x128xf32>
    %14 = math.cos %11 : vector<1x128xf32>
    %15 = math.sin %11 : vector<1x128xf32>
    %c2 = arith.constant 2 : index
    %c0_5 = arith.constant 0 : index
    %16 = vector.load %arg1[%c2, %c0_5] : memref<8x128xf32, #tpu.memory_space<vmem>>, vector<1x128xf32>
    %c3 = arith.constant 3 : index
    %c0_6 = arith.constant 0 : index
    %17 = vector.load %arg1[%c3, %c0_6] : memref<8x128xf32, #tpu.memory_space<vmem>>, vector<1x128xf32>
    %cst_7 = arith.constant 1.73205078 : f32
    %18 = vector.broadcast %cst_7 : f32 to vector<1x128xf32>
    %19 = arith.mulf %16, %18 : vector<1x128xf32>
    %cst_8 = arith.constant 0.000000e+00 : f32
    %20 = vector.broadcast %cst_8 : f32 to vector<1x128xf32>
    %21 = arith.mulf %17, %20 : vector<1x128xf32>
    %22 = arith.addf %19, %21 : vector<1x128xf32>
    %23 = math.exp %22 : vector<1x128xf32>
    %cst_9 = arith.constant 0.866025388 : f32
    %24 = vector.broadcast %cst_9 : f32 to vector<1x128xf32>
    %25 = arith.mulf %16, %24 : vector<1x128xf32>
    %cst_10 = arith.constant 1.500000e+00 : f32
    %26 = vector.broadcast %cst_10 : f32 to vector<1x128xf32>
    %27 = arith.mulf %17, %26 : vector<1x128xf32>
    %28 = arith.addf %25, %27 : vector<1x128xf32>
    %29 = math.exp %28 : vector<1x128xf32>
    %30 = arith.mulf %23, %12 : vector<1x128xf32>
    %31 = arith.mulf %23, %13 : vector<1x128xf32>
    %32 = arith.mulf %29, %14 : vector<1x128xf32>
    %33 = arith.mulf %29, %15 : vector<1x128xf32>
    %c0_11 = arith.constant 0 : index
    %c0_12 = arith.constant 0 : index
    %34 = vector.load %arg2[%c0_11, %c0_12] : memref<128x8xf32, #tpu.memory_space<vmem>>, vector<128x8xf32>
    %35 = vector.extract_strided_slice %34 {offsets = [0, 0], sizes = [128, 1], strides = [1, 1]} : vector<128x8xf32> to vector<128x1xf32>
    %36 = vector.extract_strided_slice %34 {offsets = [0, 1], sizes = [128, 1], strides = [1, 1]} : vector<128x8xf32> to vector<128x1xf32>
    %37 = vector.broadcast %36 : vector<128x1xf32> to vector<128x128xf32>
    %38 = vector.broadcast %30 : vector<1x128xf32> to vector<128x128xf32>
    %39 = arith.mulf %37, %38 : vector<128x128xf32>
    %40 = vector.broadcast %35 : vector<128x1xf32> to vector<128x128xf32>
    %41 = arith.addf %40, %39 : vector<128x128xf32>
    %42 = vector.extract_strided_slice %34 {offsets = [0, 2], sizes = [128, 1], strides = [1, 1]} : vector<128x8xf32> to vector<128x1xf32>
    %43 = vector.broadcast %42 : vector<128x1xf32> to vector<128x128xf32>
    %44 = vector.broadcast %31 : vector<1x128xf32> to vector<128x128xf32>
    %45 = arith.mulf %43, %44 : vector<128x128xf32>
    %46 = arith.addf %41, %45 : vector<128x128xf32>
    %47 = vector.extract_strided_slice %34 {offsets = [0, 3], sizes = [128, 1], strides = [1, 1]} : vector<128x8xf32> to vector<128x1xf32>
    %48 = vector.broadcast %47 : vector<128x1xf32> to vector<128x128xf32>
    %49 = vector.broadcast %32 : vector<1x128xf32> to vector<128x128xf32>
    %50 = arith.mulf %48, %49 : vector<128x128xf32>
    %51 = arith.addf %46, %50 : vector<128x128xf32>
    %52 = vector.extract_strided_slice %34 {offsets = [0, 4], sizes = [128, 1], strides = [1, 1]} : vector<128x8xf32> to vector<128x1xf32>
    %53 = vector.broadcast %52 : vector<128x1xf32> to vector<128x128xf32>
    %54 = vector.broadcast %33 : vector<1x128xf32> to vector<128x128xf32>
    %55 = arith.mulf %53, %54 : vector<128x128xf32>
    %56 = arith.addf %51, %55 : vector<128x128xf32>
    %c0_13 = arith.constant 0 : index
    %c0_14 = arith.constant 0 : index
    %57 = vector.load %arg3[%c0_13, %c0_14] : memref<128x128xf32, #tpu.memory_space<vmem>>, vector<128x128xf32>
    tpu.vector_store %arg3[%c0_13, %c0_14], %56 {strides = array<i32>} : memref<128x128xf32, #tpu.memory_space<vmem>>, vector<128x128xf32>,
    return
  }
  func.func @transform_0(%arg0: i32) -> (i32, i32) {
    %c0_i32 = arith.constant 0 : i32
    %c0_i32_0 = arith.constant 0 : i32
    return %c0_i32, %arg0 : i32, i32
  }
  func.func @transform_1(%arg0: i32) -> (i32, i32) {
    %c0_i32 = arith.constant 0 : i32
    %c0_i32_0 = arith.constant 0 : i32
    %c0_i32_1 = arith.constant 0 : i32
    return %c0_i32, %c0_i32_0 : i32, i32
  }
  func.func @transform_2(%arg0: i32) -> (i32, i32) {
    %c0_i32 = arith.constant 0 : i32
    %c0_i32_0 = arith.constant 0 : i32
    return %c0_i32, %arg0 : i32, i32
  }
}

</mosaic_0001>

<llo_original>
// kernel: custom-call
$region0: #{custom-call}
  %s0 = inlined_call_operand.vmem [shape: f32[16,8,8], index: 0, kind: input, shape index: {}]
  %s1 = inlined_call_operand.vmem [shape: f32[16,8,8], index: 1, kind: input, shape index: {}]
  %s2 = inlined_call_operand.hbm [shape: c64[16,8,8], index: 2, kind: output, shape index: {}]
  %s3 = scalar_lea.hbm %s2, 1024
  $region1: #{custom-call} parent=0
    #allocation0 [shape = 's32[1]{0}', space=sflag, size = 0x4, scoped, tag = 'scoped memory for custom-call']
    %4 = vsyncpa [#allocation0], 0
    %s5 = sshll.u32 %s0, 4
    %s6 = int_to_ptr.vmem [resolvable:$true] %s5
    %8 = dma.vmem_to_hbm [thread:$0]  %s6, 1024, %s2, [#allocation0]
    %9 = dma.done [#allocation0], 1024
    %10 = vsyncpa [#allocation0], 1
  $region2: #{custom-call} parent=0
    #allocation1 [shape = 's32[1]{0}', space=sflag, size = 0x4, scoped, tag = 'scoped memory for custom-call']
    %11 = vsyncpa [#allocation1], 0
    %s12 = sshll.u32 %s1, 4
    %s13 = int_to_ptr.vmem [resolvable:$true] %s12
    %15 = dma.vmem_to_hbm [thread:$0]  %s13, 1024, %s3, [#allocation1]
    %16 = dma.done [#allocation1], 1024
    %17 = vsyncpa [#allocation1], 1

// kernel: _bulk_h_device.1
$region0: #{_bulk_h_device.1}
  #allocation0 [shape = 'u32[]', space=smem, size = 0x4, offset = 0x4, fixed_abs, tag = 'smem constant byte address 0x4 - core index']
  #allocation1 [shape = 'u32[144,128]{1,0:T(1,128)}', space=vmem, size = 0x12000, scoped, tag = 'internal scratch']
  %s0 = inlined_call_operand.vmem [shape: f32[8,128], index: 0, kind: input, shape index: {}]
  %s1 = inlined_call_operand.vmem [shape: f32[128,8], index: 1, kind: input, shape index: {}]
  %s2 = inlined_call_operand.vmem [shape: f32[128,128], index: 2, kind: output, shape index: {}]
  %s3 = sld [smem:[#allocation0]]
  $region18: #{_bulk_h_device.1} parent=0
    _
  %s5 = ssub.s32 1, %s3
  %s6 = scalar_select 0, %s5, %s3
  // Predicated region
  $region2: #{_bulk_h_device.1} parent=0 // pred_check
    _
  $region3: #{_bulk_h_device.1} parent=0 // pred_check_branch
    %8 = sbr.rel (0) target = $region5
  $region4: #{_bulk_h_device.1} parent=0 // pred_region
    _
  $region5: #{_bulk_h_device.1} parent=0 // pred_fallthru
    _
  // Predicated region
  $region6: #{_bulk_h_device.1} parent=0 // pred_check
    _
  $region7: #{_bulk_h_device.1} parent=0 // pred_check_branch
    %10 = sbr.rel (0) target = $region9
  $region8: #{_bulk_h_device.1} parent=0 // pred_region
    _
  $region9: #{_bulk_h_device.1} parent=0 // pred_fallthru
    _
  %v11 = vld [vmem:[%s0] sm:$0x1]
  %v12 = vld [vmem:[%s0 + $0x1] sm:$0x1]
  %v13 = vmul.f32 %v11, 1.7320508
  %v14 = vmul.f32 %v12, 0.0
  %v15 = vadd.f32 %v13, %v14
  %v16 = vmul.f32 %v11, 0.8660254
  %v17 = vmul.f32 %v12, 1.5
  %v18 = vadd.f32 %v16, %v17
  %v19 = vand.u32 2147483647, %v15
  %vm20 = vcmp.le.f32.partialorder %v19, 0.7853982
  %vm21 = vcmp.lt.s32.totalorder %v15, 0
  %v22 = vand.u32 %v15, 2139095040
  %v23 = vshrl.u32 %v22, 23
  %v24 = vsub.s32 %v23, 127
  %v25 = vand.u32 2147483647, %v15
  %v26 = vand.u32 %v25, 8388607
  %v27 = vor.u32 %v26, 8388608
  %v28 = vsub.s32 0, %v27
  %v29 = vadd.s32 %v24, 1
  %vm30 = vcmp.gt.s32.totalorder %v29, 0
  %v31 = vsel %vm30, %v29, 0
  %v32 = vshrl.u32 %v31, 5
  %v33 = vand.u32 %v31, 31
  %v34 = vsub.s32 32, %v33
  %v35 = vshrl.u32 683565275, %v34
  %v36 = vshll.u32 683565275, %v33
  %v37 = vshrl.u32 2475754826, %v34
  %v38 = vor.u32 %v36, %v37
  %v39 = vshll.u32 2475754826, %v33
  %v40 = vshrl.u32 2131351028, %v34
  %v41 = vor.u32 %v39, %v40
  %v42 = vshll.u32 2131351028, %v33
  %v43 = vshrl.u32 2102212464, %v34
  %v44 = vor.u32 %v42, %v43
  %v45 = vshll.u32 2102212464, %v33
  %v46 = vshrl.u32 920167782, %v34
  %v47 = vor.u32 %v45, %v46
  %v48 = vshll.u32 920167782, %v33
  %v49 = vshrl.u32 1326507024, %v34
  %v50 = vor.u32 %v48, %v49
  %vm51 = vcmp.lt.s32.totalorder %v32, 1
  %vm52 = vcmp.lt.s32.totalorder %v32, 2
  %vm53 = vcmp.lt.s32.totalorder %v32, 3
  %vm54 = vcmp.lt.s32.totalorder %v32, 4
  %v55 = vsel %vm51, %v35, %v38
  %v56 = vsel %vm54, %v44, 2102212464
  %v57 = vsel %vm53, %v41, %v56
  %v58 = vsel %vm52, %v55, %v57
  %v59 = vsel %vm51, %v38, %v41
  %v60 = vsel %vm54, %v47, 920167782
  %v61 = vsel %vm53, %v44, %v60
  %v62 = vsel %vm52, %v59, %v61
  %v63 = vsel %vm51, %v41, %v44
  %v64 = vsel %vm54, %v50, 1326507024
  %v65 = vsel %vm53, %v47, %v64
  %v66 = vsel %vm52, %v63, %v65
  %v67 = vshll.u32 %v27, 8
  %v68 = vmul.u32.u64.compose %v67, %v66
  %v69 = vextract.low.u32 %v68
  %v70 = vextract.high.u32 %v68
  %v71 = vmul.u32.u64.compose %v67, %v62
  %v72 = vextract.low.u32 %v71
  %v73 = vextract.high.u32 %v71
  %v74 = vmul.u32 %v67, %v58
  %v75 = vadd.s32 %v70, %v72
  %vm76 = vc.u32 %v70, %v72
  %v77 = vadd.s32 %v73, 1
  %v78 = vsel %vm76, %v77, %v73
  %v79 = vadd.s32 %v74, %v78
  %v80 = vadd.s32 %v79, 536870912
  %v81 = vshrl.u32 %v80, 30
  %v82 = vshll.u32 %v81, 30
  %v83 = vsub.s32 %v79, %v82
  %vm84 = vcmp.lt.s32.totalorder %v83, 0
  %v85 = vsub.s32 0, %v83
  %v86 = vsel %vm84, %v85, %v83
  %v87 = vclz %v86
  %v88 = vsub.s32 %v87, 2
  %vm89 = vcmp.gt.s32.totalorder 0, %v88
  %v90 = vsel %vm89, 0, %v88
  %v91 = vsub.s32 32, %v90
  %v92 = vshll.u32 %v83, %v90
  %v93 = vshrl.u32 %v75, %v91
  %v94 = vor.u32 %v92, %v93
  %v95 = vsub.s32 4294967266, %v90
  %v96 = vadd.s32 %v95, 127
  %v97 = vshll.u32 %v96, 23
  %v98 = vor.u32 4788187, %v97
  %v99 = vand.u32 2147483647, %v98
  %v101 = vcvt.s32.f32 %v94
  %v102 = vmul.f32 %v101, %v99
  %v103 = vxor.u32 %v102, 2147483648
  %v104 = vsel %vm21, %v103, %v102
  %v105 = vsub.s32 4, %v81
  %v106 = vsel %vm21, %v105, %v81
  %v107 = vsel %vm20, %v15, %v104
  %v108 = vsel %vm20, 0, %v106
  %v109 = vcosq.f32.pop %v107
  %v110 = vsinq.f32.pop %v107
  %vm111 = vweird.f32 %v15
  %v112 = vand.u32 %v108, 3
  %vm113 = vcmp.lt.s32.totalorder %v112, 2
  %vm114 = vcmp.eq.s32.totalorder %v112, 0
  %v115 = vxor.u32 %v110, 2147483648
  %v116 = vsel %vm114, %v109, %v115
  %vm117 = vcmp.eq.s32.totalorder %v112, 2
  %v118 = vxor.u32 %v109, 2147483648
  %v119 = vsel %vm117, %v118, %v110
  %v120 = vsel %vm113, %v116, %v119
  %v121 = vsel %vm111, nan, %v120
  %v122 = vand.u32 2147483647, %v15
  %vm123 = vcmp.le.f32.partialorder %v122, 0.7853982
  %vm124 = vcmp.lt.s32.totalorder %v15, 0
  %v125 = vand.u32 %v15, 2139095040
  %v126 = vshrl.u32 %v125, 23
  %v127 = vsub.s32 %v126, 127
  %v128 = vand.u32 2147483647, %v15
  %v129 = vand.u32 %v128, 8388607
  %v130 = vor.u32 %v129, 8388608
  %v131 = vsub.s32 0, %v130
  %v132 = vadd.s32 %v127, 1
  %vm133 = vcmp.gt.s32.totalorder %v132, 0
  %v134 = vsel %vm133, %v132, 0
  %v135 = vshrl.u32 %v134, 5
  %v136 = vand.u32 %v134, 31
  %v137 = vsub.s32 32, %v136
  %v138 = vshrl.u32 683565275, %v137
  %v139 = vshll.u32 683565275, %v136
  %v140 = vshrl.u32 2475754826, %v137
  %v141 = vor.u32 %v139, %v140
  %v142 = vshll.u32 2475754826, %v136
  %v143 = vshrl.u32 2131351028, %v137
  %v144 = vor.u32 %v142, %v143
  %v145 = vshll.u32 2131351028, %v136
  %v146 = vshrl.u32 2102212464, %v137
  %v147 = vor.u32 %v145, %v146
  %v148 = vshll.u32 2102212464, %v136
  %v149 = vshrl.u32 920167782, %v137
  %v150 = vor.u32 %v148, %v149
  %v151 = vshll.u32 920167782, %v136
  %v152 = vshrl.u32 1326507024, %v137
  %v153 = vor.u32 %v151, %v152
  %vm154 = vcmp.lt.s32.totalorder %v135, 1
  %vm155 = vcmp.lt.s32.totalorder %v135, 2
  %vm156 = vcmp.lt.s32.totalorder %v135, 3
  %vm157 = vcmp.lt.s32.totalorder %v135, 4
  %v158 = vsel %vm154, %v138, %v141
  %v159 = vsel %vm157, %v147, 2102212464
  %v160 = vsel %vm156, %v144, %v159
  %v161 = vsel %vm155, %v158, %v160
  %v162 = vsel %vm154, %v141, %v144
  %v163 = vsel %vm157, %v150, 920167782
  %v164 = vsel %vm156, %v147, %v163
  %v165 = vsel %vm155, %v162, %v164
  %v166 = vsel %vm154, %v144, %v147
  %v167 = vsel %vm157, %v153, 1326507024
  %v168 = vsel %vm156, %v150, %v167
  %v169 = vsel %vm155, %v166, %v168
  %v170 = vshll.u32 %v130, 8
  %v171 = vmul.u32.u64.compose %v170, %v169
  %v172 = vextract.low.u32 %v171
  %v173 = vextract.high.u32 %v171
  %v174 = vmul.u32.u64.compose %v170, %v165
  %v175 = vextract.low.u32 %v174
  %v176 = vextract.high.u32 %v174
  %v177 = vmul.u32 %v170, %v161
  %v178 = vadd.s32 %v173, %v175
  %vm179 = vc.u32 %v173, %v175
  %v180 = vadd.s32 %v176, 1
  %v181 = vsel %vm179, %v180, %v176
  %v182 = vadd.s32 %v177, %v181
  %v183 = vadd.s32 %v182, 536870912
  %v184 = vshrl.u32 %v183, 30
  %v185 = vshll.u32 %v184, 30
  %v186 = vsub.s32 %v182, %v185
  %vm187 = vcmp.lt.s32.totalorder %v186, 0
  %v188 = vsub.s32 0, %v186
  %v189 = vsel %vm187, %v188, %v186
  %v190 = vclz %v189
  %v191 = vsub.s32 %v190, 2
  %vm192 = vcmp.gt.s32.totalorder 0, %v191
  %v193 = vsel %vm192, 0, %v191
  %v194 = vsub.s32 32, %v193
  %v195 = vshll.u32 %v186, %v193
  %v196 = vshrl.u32 %v178, %v194
  %v197 = vor.u32 %v195, %v196
  %v198 = vsub.s32 4294967266, %v193
  %v199 = vadd.s32 %v198, 127
  %v200 = vshll.u32 %v199, 23
  %v201 = vor.u32 4788187, %v200
  %v202 = vand.u32 2147483647, %v201
  %v204 = vcvt.s32.f32 %v197
  %v205 = vmul.f32 %v204, %v202
  %v206 = vxor.u32 %v205, 2147483648
  %v207 = vsel %vm124, %v206, %v205
  %v208 = vsub.s32 4, %v184
  %v209 = vsel %vm124, %v208, %v184
  %v210 = vsel %vm123, %v15, %v207
  %v211 = vsel %vm123, 0, %v209
  %v212 = vcosq.f32.pop %v210
  %v213 = vsinq.f32.pop %v210
  %vm214 = vweird.f32 %v15
  %v215 = vadd.s32 %v211, 3
  %v216 = vand.u32 %v215, 3
  %vm217 = vcmp.lt.s32.totalorder %v216, 2
  %vm218 = vcmp.eq.s32.totalorder %v216, 0
  %v219 = vxor.u32 %v213, 2147483648
  %v220 = vsel %vm218, %v212, %v219
  %vm221 = vcmp.eq.s32.totalorder %v216, 2
  %v222 = vxor.u32 %v212, 2147483648
  %v223 = vsel %vm221, %v222, %v213
  %v224 = vsel %vm217, %v220, %v223
  %v225 = vsel %vm214, nan, %v224
  %v226 = vand.u32 2147483647, %v18
  %vm227 = vcmp.le.f32.partialorder %v226, 0.7853982
  %vm228 = vcmp.lt.s32.totalorder %v18, 0
  %v229 = vand.u32 %v18, 2139095040
  %v230 = vshrl.u32 %v229, 23
  %v231 = vsub.s32 %v230, 127
  %v232 = vand.u32 2147483647, %v18
  %v233 = vand.u32 %v232, 8388607
  %v234 = vor.u32 %v233, 8388608
  %v235 = vsub.s32 0, %v234
  %v236 = vadd.s32 %v231, 1
  %vm237 = vcmp.gt.s32.totalorder %v236, 0
  %v238 = vsel %vm237, %v236, 0
  %v239 = vshrl.u32 %v238, 5
  %v240 = vand.u32 %v238, 31
  %v241 = vsub.s32 32, %v240
  %v242 = vshrl.u32 683565275, %v241
  %v243 = vshll.u32 683565275, %v240
  %v244 = vshrl.u32 2475754826, %v241
  %v245 = vor.u32 %v243, %v244
  %v246 = vshll.u32 2475754826, %v240
  %v247 = vshrl.u32 2131351028, %v241
  %v248 = vor.u32 %v246, %v247
  %v249 = vshll.u32 2131351028, %v240
  %v250 = vshrl.u32 2102212464, %v241
  %v251 = vor.u32 %v249, %v250
  %v252 = vshll.u32 2102212464, %v240
  %v253 = vshrl.u32 920167782, %v241
  %v254 = vor.u32 %v252, %v253
  %v255 = vshll.u32 920167782, %v240
  %v256 = vshrl.u32 1326507024, %v241
  %v257 = vor.u32 %v255, %v256
  %vm258 = vcmp.lt.s32.totalorder %v239, 1
  %vm259 = vcmp.lt.s32.totalorder %v239, 2
  %vm260 = vcmp.lt.s32.totalorder %v239, 3
  %vm261 = vcmp.lt.s32.totalorder %v239, 4
  %v262 = vsel %vm258, %v242, %v245
  %v263 = vsel %vm261, %v251, 2102212464
  %v264 = vsel %vm260, %v248, %v263
  %v265 = vsel %vm259, %v262, %v264
  %v266 = vsel %vm258, %v245, %v248
  %v267 = vsel %vm261, %v254, 920167782
  %v268 = vsel %vm260, %v251, %v267
  %v269 = vsel %vm259, %v266, %v268
  %v270 = vsel %vm258, %v248, %v251
  %v271 = vsel %vm261, %v257, 1326507024
  %v272 = vsel %vm260, %v254, %v271
  %v273 = vsel %vm259, %v270, %v272
  %v274 = vshll.u32 %v234, 8
  %v275 = vmul.u32.u64.compose %v274, %v273
  %v276 = vextract.low.u32 %v275
  %v277 = vextract.high.u32 %v275
  %v278 = vmul.u32.u64.compose %v274, %v269
  %v279 = vextract.low.u32 %v278
  %v280 = vextract.high.u32 %v278
  %v281 = vmul.u32 %v274, %v265
  %v282 = vadd.s32 %v277, %v279
  %vm283 = vc.u32 %v277, %v279
  %v284 = vadd.s32 %v280, 1
  %v285 = vsel %vm283, %v284, %v280
  %v286 = vadd.s32 %v281, %v285
  %v287 = vadd.s32 %v286, 536870912
  %v288 = vshrl.u32 %v287, 30
  %v289 = vshll.u32 %v288, 30
  %v290 = vsub.s32 %v286, %v289
  %vm291 = vcmp.lt.s32.totalorder %v290, 0
  %v292 = vsub.s32 0, %v290
  %v293 = vsel %vm291, %v292, %v290
  %v294 = vclz %v293
  %v295 = vsub.s32 %v294, 2
  %vm296 = vcmp.gt.s32.totalorder 0, %v295
  %v297 = vsel %vm296, 0, %v295
  %v298 = vsub.s32 32, %v297
  %v299 = vshll.u32 %v290, %v297
  %v300 = vshrl.u32 %v282, %v298
  %v301 = vor.u32 %v299, %v300
  %v302 = vsub.s32 4294967266, %v297
  %v303 = vadd.s32 %v302, 127
  %v304 = vshll.u32 %v303, 23
  %v305 = vor.u32 4788187, %v304
  %v306 = vand.u32 2147483647, %v305
  %v308 = vcvt.s32.f32 %v301
  %v309 = vmul.f32 %v308, %v306
  %v310 = vxor.u32 %v309, 2147483648
  %v311 = vsel %vm228, %v310, %v309
  %v312 = vsub.s32 4, %v288
  %v313 = vsel %vm228, %v312, %v288
  %v314 = vsel %vm227, %v18, %v311
  %v315 = vsel %vm227, 0, %v313
  %v316 = vcosq.f32.pop %v314
  %v317 = vsinq.f32.pop %v314
  %vm318 = vweird.f32 %v18
  %v319 = vand.u32 %v315, 3
  %vm320 = vcmp.lt.s32.totalorder %v319, 2
  %vm321 = vcmp.eq.s32.totalorder %v319, 0
  %v322 = vxor.u32 %v317, 2147483648
  %v323 = vsel %vm321, %v316, %v322
  %vm324 = vcmp.eq.s32.totalorder %v319, 2
  %v325 = vxor.u32 %v316, 2147483648
  %v326 = vsel %vm324, %v325, %v317
  %v327 = vsel %vm320, %v323, %v326
  %v328 = vsel %vm318, nan, %v327
  %v329 = vand.u32 2147483647, %v18
  %vm330 = vcmp.le.f32.partialorder %v329, 0.7853982
  %vm331 = vcmp.lt.s32.totalorder %v18, 0
  %v332 = vand.u32 %v18, 2139095040
  %v333 = vshrl.u32 %v332, 23
  %v334 = vsub.s32 %v333, 127
  %v335 = vand.u32 2147483647, %v18
  %v336 = vand.u32 %v335, 8388607
  %v337 = vor.u32 %v336, 8388608
  %v338 = vsub.s32 0, %v337
  %v339 = vadd.s32 %v334, 1
  %vm340 = vcmp.gt.s32.totalorder %v339, 0
  %v341 = vsel %vm340, %v339, 0
  %v342 = vshrl.u32 %v341, 5
  %v343 = vand.u32 %v341, 31
  %v344 = vsub.s32 32, %v343
  %v345 = vshrl.u32 683565275, %v344
  %v346 = vshll.u32 683565275, %v343
  %v347 = vshrl.u32 2475754826, %v344
  %v348 = vor.u32 %v346, %v347
  %v349 = vshll.u32 2475754826, %v343
  %v350 = vshrl.u32 2131351028, %v344
  %v351 = vor.u32 %v349, %v350
  %v352 = vshll.u32 2131351028, %v343
  %v353 = vshrl.u32 2102212464, %v344
  %v354 = vor.u32 %v352, %v353
  %v355 = vshll.u32 2102212464, %v343
  %v356 = vshrl.u32 920167782, %v344
  %v357 = vor.u32 %v355, %v356
  %v358 = vshll.u32 920167782, %v343
  %v359 = vshrl.u32 1326507024, %v344
  %v360 = vor.u32 %v358, %v359
  %vm361 = vcmp.lt.s32.totalorder %v342, 1
  %vm362 = vcmp.lt.s32.totalorder %v342, 2
  %vm363 = vcmp.lt.s32.totalorder %v342, 3
  %vm364 = vcmp.lt.s32.totalorder %v342, 4
  %v365 = vsel %vm361, %v345, %v348
  %v366 = vsel %vm364, %v354, 2102212464
  %v367 = vsel %vm363, %v351, %v366
  %v368 = vsel %vm362, %v365, %v367
  %v369 = vsel %vm361, %v348, %v351
  %v370 = vsel %vm364, %v357, 920167782
  %v371 = vsel %vm363, %v354, %v370
  %v372 = vsel %vm362, %v369, %v371
  %v373 = vsel %vm361, %v351, %v354
  %v374 = vsel %vm364, %v360, 1326507024
  %v375 = vsel %vm363, %v357, %v374
  %v376 = vsel %vm362, %v373, %v375
  %v377 = vshll.u32 %v337, 8
  %v378 = vmul.u32.u64.compose %v377, %v376
  %v379 = vextract.low.u32 %v378
  %v380 = vextract.high.u32 %v378
  %v381 = vmul.u32.u64.compose %v377, %v372
  %v382 = vextract.low.u32 %v381
  %v383 = vextract.high.u32 %v381
  %v384 = vmul.u32 %v377, %v368
  %v385 = vadd.s32 %v380, %v382
  %vm386 = vc.u32 %v380, %v382
  %v387 = vadd.s32 %v383, 1
  %v388 = vsel %vm386, %v387, %v383
  %v389 = vadd.s32 %v384, %v388
  %v390 = vadd.s32 %v389, 536870912
  %v391 = vshrl.u32 %v390, 30
  %v392 = vshll.u32 %v391, 30
  %v393 = vsub.s32 %v389, %v392
  %vm394 = vcmp.lt.s32.totalorder %v393, 0
  %v395 = vsub.s32 0, %v393
  %v396 = vsel %vm394, %v395, %v393
  %v397 = vclz %v396
  %v398 = vsub.s32 %v397, 2
  %vm399 = vcmp.gt.s32.totalorder 0, %v398
  %v400 = vsel %vm399, 0, %v398
  %v401 = vsub.s32 32, %v400
  %v402 = vshll.u32 %v393, %v400
  %v403 = vshrl.u32 %v385, %v401
  %v404 = vor.u32 %v402, %v403
  %v405 = vsub.s32 4294967266, %v400
  %v406 = vadd.s32 %v405, 127
  %v407 = vshll.u32 %v406, 23
  %v408 = vor.u32 4788187, %v407
  %v409 = vand.u32 2147483647, %v408
  %v411 = vcvt.s32.f32 %v404
  %v412 = vmul.f32 %v411, %v409
  %v413 = vxor.u32 %v412, 2147483648
  %v414 = vsel %vm331, %v413, %v412
  %v415 = vsub.s32 4, %v391
  %v416 = vsel %vm331, %v415, %v391
  %v417 = vsel %vm330, %v18, %v414
  %v418 = vsel %vm330, 0, %v416
  %v419 = vcosq.f32.pop %v417
  %v420 = vsinq.f32.pop %v417
  %vm421 = vweird.f32 %v18
  %v422 = vadd.s32 %v418, 3
  %v423 = vand.u32 %v422, 3
  %vm424 = vcmp.lt.s32.totalorder %v423, 2
  %vm425 = vcmp.eq.s32.totalorder %v423, 0
  %v426 = vxor.u32 %v420, 2147483648
  %v427 = vsel %vm425, %v419, %v426
  %vm428 = vcmp.eq.s32.totalorder %v423, 2
  %v429 = vxor.u32 %v419, 2147483648
  %v430 = vsel %vm428, %v429, %v420
  %v431 = vsel %vm424, %v427, %v430
  %v432 = vsel %vm421, nan, %v431
  %v433 = vld [vmem:[%s0 + $0x2] sm:$0x1]
  %v434 = vld [vmem:[%s0 + $0x3] sm:$0x1]
  %v435 = vmul.f32 %v433, 1.7320508
  %v436 = vmul.f32 %v434, 0.0
  %v437 = vadd.f32 %v435, %v436
  %v438 = vmul.f32 %v437, 1.442695
  %v439 = vpow.pop %v438
  %v440 = vmul.f32 %v433, 0.8660254
  %v441 = vmul.f32 %v434, 1.5
  %v442 = vadd.f32 %v440, %v441
  %v443 = vmul.f32 %v442, 1.442695
  %v444 = vpow.pop %v443
  %v445 = vmul.f32 %v439, %v121
  %v446 = vmul.f32 %v439, %v225
  %v447 = vmul.f32 %v444, %v328
  %v448 = vmul.f32 %v444, %v432
  %v449 = vld [vmem:[%s1] sm:$0xff]
  %v450 = vld [vmem:[%s1 + $0x8] sm:$0xff]
  %v451 = vld [vmem:[%s1 + $0x10] sm:$0xff]
  %v452 = vld [vmem:[%s1 + $0x18] sm:$0xff]
  %v453 = vld [vmem:[%s1 + $0x20] sm:$0xff]
  %v454 = vld [vmem:[%s1 + $0x28] sm:$0xff]
  %v455 = vld [vmem:[%s1 + $0x30] sm:$0xff]
  %v456 = vld [vmem:[%s1 + $0x38] sm:$0xff]
  %v457 = vld [vmem:[%s1 + $0x40] sm:$0xff]
  %v458 = vld [vmem:[%s1 + $0x48] sm:$0xff]
  %v459 = vld [vmem:[%s1 + $0x50] sm:$0xff]
  %v460 = vld [vmem:[%s1 + $0x58] sm:$0xff]
  %v461 = vld [vmem:[%s1 + $0x60] sm:$0xff]
  %v462 = vld [vmem:[%s1 + $0x68] sm:$0xff]
  %v463 = vld [vmem:[%s1 + $0x70] sm:$0xff]
  %v464 = vld [vmem:[%s1 + $0x78] sm:$0xff]
  %466 = vset.pattern.permute.xlu0 1
  %467 = vperm.xlu0 %466, %v449
  %v468 = vpop.permute.xlu0 %467
  %471 = vset.pattern.permute.xlu0 1
  %472 = vperm.xlu0 %471, %v450
  %v473 = vpop.permute.xlu0 %472
  %476 = vset.pattern.permute.xlu0 1
  %477 = vperm.xlu0 %476, %v451
  %v478 = vpop.permute.xlu0 %477
  %481 = vset.pattern.permute.xlu0 1
  %482 = vperm.xlu0 %481, %v452
  %v483 = vpop.permute.xlu0 %482
  %486 = vset.pattern.permute.xlu0 1
  %487 = vperm.xlu0 %486, %v453
  %v488 = vpop.permute.xlu0 %487
  %491 = vset.pattern.permute.xlu0 1
  %492 = vperm.xlu0 %491, %v454
  %v493 = vpop.permute.xlu0 %492
  %496 = vset.pattern.permute.xlu0 1
  %497 = vperm.xlu0 %496, %v455
  %v498 = vpop.permute.xlu0 %497
  %501 = vset.pattern.permute.xlu0 1
  %502 = vperm.xlu0 %501, %v456
  %v503 = vpop.permute.xlu0 %502
  %506 = vset.pattern.permute.xlu0 1
  %507 = vperm.xlu0 %506, %v457
  %v508 = vpop.permute.xlu0 %507
  %511 = vset.pattern.permute.xlu0 1
  %512 = vperm.xlu0 %511, %v458
  %v513 = vpop.permute.xlu0 %512
  %516 = vset.pattern.permute.xlu0 1
  %517 = vperm.xlu0 %516, %v459
  %v518 = vpop.permute.xlu0 %517
  %521 = vset.pattern.permute.xlu0 1
  %522 = vperm.xlu0 %521, %v460
  %v523 = vpop.permute.xlu0 %522
  %526 = vset.pattern.permute.xlu0 1
  %527 = vperm.xlu0 %526, %v461
  %v528 = vpop.permute.xlu0 %527
  %531 = vset.pattern.permute.xlu0 1
  %532 = vperm.xlu0 %531, %v462
  %v533 = vpop.permute.xlu0 %532
  %536 = vset.pattern.permute.xlu0 1
  %537 = vperm.xlu0 %536, %v463
  %v538 = vpop.permute.xlu0 %537
  %541 = vset.pattern.permute.xlu0 1
  %542 = vperm.xlu0 %541, %v464
  %v543 = vpop.permute.xlu0 %542
  %v545 = vlaneseq
  %v546 = vshrl.u32 %v545, 7
  %v547 = vsub.s32 0, %v546
  %v548 = vrot.slane %v445, %v547
  %v549 = vmul.f32 %v468, %v548
  %v550 = vmul.f32 %v473, %v548
  %v551 = vmul.f32 %v478, %v548
  %v552 = vmul.f32 %v483, %v548
  %v553 = vmul.f32 %v488, %v548
  %v554 = vmul.f32 %v493, %v548
  %v555 = vmul.f32 %v498, %v548
  %v556 = vmul.f32 %v503, %v548
  %v557 = vmul.f32 %v508, %v548
  %v558 = vmul.f32 %v513, %v548
  %v559 = vmul.f32 %v518, %v548
  %v560 = vmul.f32 %v523, %v548
  %v561 = vmul.f32 %v528, %v548
  %v562 = vmul.f32 %v533, %v548
  %v563 = vmul.f32 %v538, %v548
  %v564 = vmul.f32 %v543, %v548
  %565 = vset.pattern.permute.xlu0 0
  %566 = vperm.xlu0 %565, %v449
  %v567 = vpop.permute.xlu0 %566
  %569 = vset.pattern.permute.xlu0 0
  %570 = vperm.xlu0 %569, %v450
  %v571 = vpop.permute.xlu0 %570
  %573 = vset.pattern.permute.xlu0 0
  %574 = vperm.xlu0 %573, %v451
  %v575 = vpop.permute.xlu0 %574
  %577 = vset.pattern.permute.xlu0 0
  %578 = vperm.xlu0 %577, %v452
  %v579 = vpop.permute.xlu0 %578
  %581 = vset.pattern.permute.xlu0 0
  %582 = vperm.xlu0 %581, %v453
  %v583 = vpop.permute.xlu0 %582
  %585 = vset.pattern.permute.xlu0 0
  %586 = vperm.xlu0 %585, %v454
  %v587 = vpop.permute.xlu0 %586
  %589 = vset.pattern.permute.xlu0 0
  %590 = vperm.xlu0 %589, %v455
  %v591 = vpop.permute.xlu0 %590
  %593 = vset.pattern.permute.xlu0 0
  %594 = vperm.xlu0 %593, %v456
  %v595 = vpop.permute.xlu0 %594
  %597 = vset.pattern.permute.xlu0 0
  %598 = vperm.xlu0 %597, %v457
  %v599 = vpop.permute.xlu0 %598
  %601 = vset.pattern.permute.xlu0 0
  %602 = vperm.xlu0 %601, %v458
  %v603 = vpop.permute.xlu0 %602
  %605 = vset.pattern.permute.xlu0 0
  %606 = vperm.xlu0 %605, %v459
  %v607 = vpop.permute.xlu0 %606
  %609 = vset.pattern.permute.xlu0 0
  %610 = vperm.xlu0 %609, %v460
  %v611 = vpop.permute.xlu0 %610
  %613 = vset.pattern.permute.xlu0 0
  %614 = vperm.xlu0 %613, %v461
  %v615 = vpop.permute.xlu0 %614
  %617 = vset.pattern.permute.xlu0 0
  %618 = vperm.xlu0 %617, %v462
  %v619 = vpop.permute.xlu0 %618
  %621 = vset.pattern.permute.xlu0 0
  %622 = vperm.xlu0 %621, %v463
  %v623 = vpop.permute.xlu0 %622
  %625 = vset.pattern.permute.xlu0 0
  %626 = vperm.xlu0 %625, %v464
  %v627 = vpop.permute.xlu0 %626
  %v629 = vadd.f32 %v567, %v549
  %v630 = vadd.f32 %v571, %v550
  %v631 = vadd.f32 %v575, %v551
  %v632 = vadd.f32 %v579, %v552
  %v633 = vadd.f32 %v583, %v553
  %v634 = vadd.f32 %v587, %v554
  %v635 = vadd.f32 %v591, %v555
  %v636 = vadd.f32 %v595, %v556
  %v637 = vadd.f32 %v599, %v557
  %v638 = vadd.f32 %v603, %v558
  %v639 = vadd.f32 %v607, %v559
  %v640 = vadd.f32 %v611, %v560
  %v641 = vadd.f32 %v615, %v561
  %v642 = vadd.f32 %v619, %v562
  %v643 = vadd.f32 %v623, %v563
  %v644 = vadd.f32 %v627, %v564
  %645 = vset.pattern.permute.xlu0 2
  %646 = vperm.xlu0 %645, %v449
  %v647 = vpop.permute.xlu0 %646
  %649 = vset.pattern.permute.xlu0 2
  %650 = vperm.xlu0 %649, %v450
  %v651 = vpop.permute.xlu0 %650
  %653 = vset.pattern.permute.xlu0 2
  %654 = vperm.xlu0 %653, %v451
  %v655 = vpop.permute.xlu0 %654
  %657 = vset.pattern.permute.xlu0 2
  %658 = vperm.xlu0 %657, %v452
  %v659 = vpop.permute.xlu0 %658
  %661 = vset.pattern.permute.xlu0 2
  %662 = vperm.xlu0 %661, %v453
  %v663 = vpop.permute.xlu0 %662
  %665 = vset.pattern.permute.xlu0 2
  %666 = vperm.xlu0 %665, %v454
  %v667 = vpop.permute.xlu0 %666
  %669 = vset.pattern.permute.xlu0 2
  %670 = vperm.xlu0 %669, %v455
  %v671 = vpop.permute.xlu0 %670
  %673 = vset.pattern.permute.xlu0 2
  %674 = vperm.xlu0 %673, %v456
  %v675 = vpop.permute.xlu0 %674
  %677 = vset.pattern.permute.xlu0 2
  %678 = vperm.xlu0 %677, %v457
  %v679 = vpop.permute.xlu0 %678
  %681 = vset.pattern.permute.xlu0 2
  %682 = vperm.xlu0 %681, %v458
  %v683 = vpop.permute.xlu0 %682
  %685 = vset.pattern.permute.xlu0 2
  %686 = vperm.xlu0 %685, %v459
  %v687 = vpop.permute.xlu0 %686
  %689 = vset.pattern.permute.xlu0 2
  %690 = vperm.xlu0 %689, %v460
  %v691 = vpop.permute.xlu0 %690
  %693 = vset.pattern.permute.xlu0 2
  %694 = vperm.xlu0 %693, %v461
  %v695 = vpop.permute.xlu0 %694
  %697 = vset.pattern.permute.xlu0 2
  %698 = vperm.xlu0 %697, %v462
  %v699 = vpop.permute.xlu0 %698
  %701 = vset.pattern.permute.xlu0 2
  %702 = vperm.xlu0 %701, %v463
  %v703 = vpop.permute.xlu0 %702
  %705 = vset.pattern.permute.xlu0 2
  %706 = vperm.xlu0 %705, %v464
  %v707 = vpop.permute.xlu0 %706
  %v709 = vlaneseq
  %v710 = vshrl.u32 %v709, 7
  %v711 = vsub.s32 0, %v710
  %v712 = vrot.slane %v446, %v711
  %v713 = vmul.f32 %v647, %v712
  %v714 = vmul.f32 %v651, %v712
  %v715 = vmul.f32 %v655, %v712
  %v716 = vmul.f32 %v659, %v712
  %v717 = vmul.f32 %v663, %v712
  %v718 = vmul.f32 %v667, %v712
  %v719 = vmul.f32 %v671, %v712
  %v720 = vmul.f32 %v675, %v712
  %v721 = vmul.f32 %v679, %v712
  %v722 = vmul.f32 %v683, %v712
  %v723 = vmul.f32 %v687, %v712
  %v724 = vmul.f32 %v691, %v712
  %v725 = vmul.f32 %v695, %v712
  %v726 = vmul.f32 %v699, %v712
  %v727 = vmul.f32 %v703, %v712
  %v728 = vmul.f32 %v707, %v712
  %v729 = vadd.f32 %v629, %v713
  %v730 = vadd.f32 %v630, %v714
  %v731 = vadd.f32 %v631, %v715
  %v732 = vadd.f32 %v632, %v716
  %v733 = vadd.f32 %v633, %v717
  %v734 = vadd.f32 %v634, %v718
  %v735 = vadd.f32 %v635, %v719
  %v736 = vadd.f32 %v636, %v720
  %v737 = vadd.f32 %v637, %v721
  %v738 = vadd.f32 %v638, %v722
  %v739 = vadd.f32 %v639, %v723
  %v740 = vadd.f32 %v640, %v724
  %v741 = vadd.f32 %v641, %v725
  %v742 = vadd.f32 %v642, %v726
  %v743 = vadd.f32 %v643, %v727
  %v744 = vadd.f32 %v644, %v728
  %745 = vset.pattern.permute.xlu0 3
  %746 = vperm.xlu0 %745, %v449
  %v747 = vpop.permute.xlu0 %746
  %749 = vset.pattern.permute.xlu0 3
  %750 = vperm.xlu0 %749, %v450
  %v751 = vpop.permute.xlu0 %750
  %753 = vset.pattern.permute.xlu0 3
  %754 = vperm.xlu0 %753, %v451
  %v755 = vpop.permute.xlu0 %754
  %757 = vset.pattern.permute.xlu0 3
  %758 = vperm.xlu0 %757, %v452
  %v759 = vpop.permute.xlu0 %758
  %761 = vset.pattern.permute.xlu0 3
  %762 = vperm.xlu0 %761, %v453
  %v763 = vpop.permute.xlu0 %762
  %765 = vset.pattern.permute.xlu0 3
  %766 = vperm.xlu0 %765, %v454
  %v767 = vpop.permute.xlu0 %766
  %769 = vset.pattern.permute.xlu0 3
  %770 = vperm.xlu0 %769, %v455
  %v771 = vpop.permute.xlu0 %770
  %773 = vset.pattern.permute.xlu0 3
  %774 = vperm.xlu0 %773, %v456
  %v775 = vpop.permute.xlu0 %774
  %777 = vset.pattern.permute.xlu0 3
  %778 = vperm.xlu0 %777, %v457
  %v779 = vpop.permute.xlu0 %778
  %781 = vset.pattern.permute.xlu0 3
  %782 = vperm.xlu0 %781, %v458
  %v783 = vpop.permute.xlu0 %782
  %785 = vset.pattern.permute.xlu0 3
  %786 = vperm.xlu0 %785, %v459
  %v787 = vpop.permute.xlu0 %786
  %789 = vset.pattern.permute.xlu0 3
  %790 = vperm.xlu0 %789, %v460
  %v791 = vpop.permute.xlu0 %790
  %793 = vset.pattern.permute.xlu0 3
  %794 = vperm.xlu0 %793, %v461
  %v795 = vpop.permute.xlu0 %794
  %797 = vset.pattern.permute.xlu0 3
  %798 = vperm.xlu0 %797, %v462
  %v799 = vpop.permute.xlu0 %798
  %801 = vset.pattern.permute.xlu0 3
  %802 = vperm.xlu0 %801, %v463
  %v803 = vpop.permute.xlu0 %802
  %805 = vset.pattern.permute.xlu0 3
  %806 = vperm.xlu0 %805, %v464
  %v807 = vpop.permute.xlu0 %806
  %v809 = vlaneseq
  %v810 = vshrl.u32 %v809, 7
  %v811 = vsub.s32 0, %v810
  %v812 = vrot.slane %v447, %v811
  %v813 = vmul.f32 %v747, %v812
  %v814 = vmul.f32 %v751, %v812
  %v815 = vmul.f32 %v755, %v812
  %v816 = vmul.f32 %v759, %v812
  %v817 = vmul.f32 %v763, %v812
  %v818 = vmul.f32 %v767, %v812
  %v819 = vmul.f32 %v771, %v812
  %v820 = vmul.f32 %v775, %v812
  %v821 = vmul.f32 %v779, %v812
  %v822 = vmul.f32 %v783, %v812
  %v823 = vmul.f32 %v787, %v812
  %v824 = vmul.f32 %v791, %v812
  %v825 = vmul.f32 %v795, %v812
  %v826 = vmul.f32 %v799, %v812
  %v827 = vmul.f32 %v803, %v812
  %v828 = vmul.f32 %v807, %v812
  %v829 = vadd.f32 %v729, %v813
  %v830 = vadd.f32 %v730, %v814
  %v831 = vadd.f32 %v731, %v815
  %v832 = vadd.f32 %v732, %v816
  %v833 = vadd.f32 %v733, %v817
  %v834 = vadd.f32 %v734, %v818
  %v835 = vadd.f32 %v735, %v819
  %v836 = vadd.f32 %v736, %v820
  %v837 = vadd.f32 %v737, %v821
  %v838 = vadd.f32 %v738, %v822
  %v839 = vadd.f32 %v739, %v823
  %v840 = vadd.f32 %v740, %v824
  %v841 = vadd.f32 %v741, %v825
  %v842 = vadd.f32 %v742, %v826
  %v843 = vadd.f32 %v743, %v827
  %v844 = vadd.f32 %v744, %v828
  %845 = vset.pattern.permute.xlu0 4
  %846 = vperm.xlu0 %845, %v449
  %v847 = vpop.permute.xlu0 %846
  %849 = vset.pattern.permute.xlu0 4
  %850 = vperm.xlu0 %849, %v450
  %v851 = vpop.permute.xlu0 %850
  %853 = vset.pattern.permute.xlu0 4
  %854 = vperm.xlu0 %853, %v451
  %v855 = vpop.permute.xlu0 %854
  %857 = vset.pattern.permute.xlu0 4
  %858 = vperm.xlu0 %857, %v452
  %v859 = vpop.permute.xlu0 %858
  %861 = vset.pattern.permute.xlu0 4
  %862 = vperm.xlu0 %861, %v453
  %v863 = vpop.permute.xlu0 %862
  %865 = vset.pattern.permute.xlu0 4
  %866 = vperm.xlu0 %865, %v454
  %v867 = vpop.permute.xlu0 %866
  %869 = vset.pattern.permute.xlu0 4
  %870 = vperm.xlu0 %869, %v455
  %v871 = vpop.permute.xlu0 %870
  %873 = vset.pattern.permute.xlu0 4
  %874 = vperm.xlu0 %873, %v456
  %v875 = vpop.permute.xlu0 %874
  %877 = vset.pattern.permute.xlu0 4
  %878 = vperm.xlu0 %877, %v457
  %v879 = vpop.permute.xlu0 %878
  %881 = vset.pattern.permute.xlu0 4
  %882 = vperm.xlu0 %881, %v458
  %v883 = vpop.permute.xlu0 %882
  %885 = vset.pattern.permute.xlu0 4
  %886 = vperm.xlu0 %885, %v459
  %v887 = vpop.permute.xlu0 %886
  %889 = vset.pattern.permute.xlu0 4
  %890 = vperm.xlu0 %889, %v460
  %v891 = vpop.permute.xlu0 %890
  %893 = vset.pattern.permute.xlu0 4
  %894 = vperm.xlu0 %893, %v461
  %v895 = vpop.permute.xlu0 %894
  %897 = vset.pattern.permute.xlu0 4
  %898 = vperm.xlu0 %897, %v462
  %v899 = vpop.permute.xlu0 %898
  %901 = vset.pattern.permute.xlu0 4
  %902 = vperm.xlu0 %901, %v463
  %v903 = vpop.permute.xlu0 %902
  %905 = vset.pattern.permute.xlu0 4
  %906 = vperm.xlu0 %905, %v464
  %v907 = vpop.permute.xlu0 %906
  %v909 = vlaneseq
  %v910 = vshrl.u32 %v909, 7
  %v911 = vsub.s32 0, %v910
  %v912 = vrot.slane %v448, %v911
  %v913 = vmul.f32 %v847, %v912
  %v914 = vmul.f32 %v851, %v912
  %v915 = vmul.f32 %v855, %v912
  %v916 = vmul.f32 %v859, %v912
  %v917 = vmul.f32 %v863, %v912
  %v918 = vmul.f32 %v867, %v912
  %v919 = vmul.f32 %v871, %v912
  %v920 = vmul.f32 %v875, %v912
  %v921 = vmul.f32 %v879, %v912
  %v922 = vmul.f32 %v883, %v912
  %v923 = vmul.f32 %v887, %v912
  %v924 = vmul.f32 %v891, %v912
  %v925 = vmul.f32 %v895, %v912
  %v926 = vmul.f32 %v899, %v912
  %v927 = vmul.f32 %v903, %v912
  %v928 = vmul.f32 %v907, %v912
  %v929 = vadd.f32 %v829, %v913
  %v930 = vadd.f32 %v830, %v914
  %v931 = vadd.f32 %v831, %v915
  %v932 = vadd.f32 %v832, %v916
  %v933 = vadd.f32 %v833, %v917
  %v934 = vadd.f32 %v834, %v918
  %v935 = vadd.f32 %v835, %v919
  %v936 = vadd.f32 %v836, %v920
  %v937 = vadd.f32 %v837, %v921
  %v938 = vadd.f32 %v838, %v922
  %v939 = vadd.f32 %v839, %v923
  %v940 = vadd.f32 %v840, %v924
  %v941 = vadd.f32 %v841, %v925
  %v942 = vadd.f32 %v842, %v926
  %v943 = vadd.f32 %v843, %v927
  %v944 = vadd.f32 %v844, %v928
  %945 = vst [vmem:[%s2] sm:$0xff] %v929
  %946 = vst [vmem:[%s2 + $0x8] sm:$0xff] %v930
  %947 = vst [vmem:[%s2 + $0x10] sm:$0xff] %v931
  %948 = vst [vmem:[%s2 + $0x18] sm:$0xff] %v932
  %949 = vst [vmem:[%s2 + $0x20] sm:$0xff] %v933
  %950 = vst [vmem:[%s2 + $0x28] sm:$0xff] %v934
  %951 = vst [vmem:[%s2 + $0x30] sm:$0xff] %v935
  %952 = vst [vmem:[%s2 + $0x38] sm:$0xff] %v936
  %953 = vst [vmem:[%s2 + $0x40] sm:$0xff] %v937
  %954 = vst [vmem:[%s2 + $0x48] sm:$0xff] %v938
  %955 = vst [vmem:[%s2 + $0x50] sm:$0xff] %v939
  %956 = vst [vmem:[%s2 + $0x58] sm:$0xff] %v940
  %957 = vst [vmem:[%s2 + $0x60] sm:$0xff] %v941
  %958 = vst [vmem:[%s2 + $0x68] sm:$0xff] %v942
  %959 = vst [vmem:[%s2 + $0x70] sm:$0xff] %v943
  %960 = vst [vmem:[%s2 + $0x78] sm:$0xff] %v944
  // Predicated region
  $region10: #{_bulk_h_device.1} parent=0 // pred_check
    _
  $region11: #{_bulk_h_device.1} parent=0 // pred_check_branch
    %962 = sbr.rel (0) target = $region13
  $region12: #{_bulk_h_device.1} parent=0 // pred_region
    _
  $region13: #{_bulk_h_device.1} parent=0 // pred_fallthru
    _
  // Predicated region
  $region14: #{_bulk_h_device.1} parent=0 // pred_check
    _
  $region15: #{_bulk_h_device.1} parent=0 // pred_check_branch
    %964 = sbr.rel (0) target = $region17
  $region16: #{_bulk_h_device.1} parent=0 // pred_region
    _
  $region17: #{_bulk_h_device.1} parent=0 // pred_fallthru
    _

</llo_original>
